<compile_context>
chip_gen: v5e
topology: v5e:2x2
jax: 0.10.0
libtpu: 0.0.40
codegen_flags: <defaults>
</compile_context>

<pallas_src>
import functools

import jax
import jax.numpy as jnp
from jax.experimental import pallas as pl
from jax.experimental.pallas import tpu as pltpu


def _linear_fusion_kernel(x_ref, w_ref, b_ref, o_ref, acc_ref, *, n_total):
    # x_ref : [TB, TN, D]   (current x tile)
    # w_ref : [D_out, D_in] (PyTorch layout, resident in VMEM)
    # b_ref : [1, D]        (resident in VMEM)
    # o_ref : [TB, D]
    # acc_ref: [TB, D] f32 scratch (running seq-sum)
    k = pl.program_id(1)

    @pl.when(k == 0)
    def _():
        acc_ref[...] = jnp.zeros_like(acc_ref)

    # Accumulate the seq-sum of this tile in f32 (no wholesale f32 copy of the tile).
    acc_ref[...] += jnp.sum(x_ref[...], axis=1, dtype=jnp.float32)

    @pl.when(k == pl.num_programs(1) - 1)
    def _():
        m = (acc_ref[...] * (1.0 / n_total)).astype(w_ref.dtype)     # [TB, D_in]
        # Contract against weight's in-dim (axis 1) -> no wrapper-side transpose.
        y = jax.lax.dot_general(
            m, w_ref[...],
            dimension_numbers=(((1,), (1,)), ((), ())),
            preferred_element_type=jnp.float32)                      # [TB, D_out]
        o_ref[...] = (y + b_ref[...].astype(jnp.float32)).astype(o_ref.dtype)


def _pick_aligned_tile(n, max_tile):
    """Largest divisor of n that is a multiple of 8 and <= max_tile; else n."""
    t = min(n, max_tile)
    t -= t % 8
    while t >= 8:
        if n % t == 0:
            return t
        t -= 8
    return n


def linear_fusion(x, weight, bias):
    """x: [B, N, D]; weight: [D, D] (PyTorch (out, in)); bias: [D]."""
    B, N, D = x.shape
    itemsize = jnp.dtype(x.dtype).itemsize

    # ---- lane/sublane alignment (no-op when already aligned) -----------------
    B_pad = ((B + 7) // 8) * 8
    D_pad = ((D + 127) // 128) * 128
    if (B_pad != B) or (D_pad != D):
        x = jnp.pad(x, ((0, B_pad - B), (0, 0), (0, D_pad - D)))
        weight = jnp.pad(weight, ((0, D_pad - D), (0, D_pad - D)))
        bias = jnp.pad(bias, (0, D_pad - D))
    b2 = bias.reshape(1, D_pad)

    # ---- tile sizing (conservative VMEM budget so it also fits v7x) ----------
    TB = _pick_aligned_tile(B_pad, 128)
    x_budget = 8 * 1024 * 1024  # bytes for the double-buffered x stream
    max_tn = max(8, x_budget // (2 * TB * D_pad * itemsize))
    TN = _pick_aligned_tile(N, min(512, max_tn))

    grid = (B_pad // TB, pl.cdiv(N, TN))

    cost = pl.CostEstimate(
        flops=2 * B_pad * D_pad * D_pad,
        transcendentals=0,
        bytes_accessed=(B_pad * N * D_pad * itemsize
                        + D_pad * D_pad * jnp.dtype(weight.dtype).itemsize
                        + B_pad * D_pad * itemsize),
    )

    out_pad = pl.pallas_call(
        functools.partial(_linear_fusion_kernel, n_total=N),
        out_shape=jax.ShapeDtypeStruct((B_pad, D_pad), x.dtype),
        grid=grid,
        in_specs=[
            pl.BlockSpec((TB, TN, D_pad), lambda i, k: (i, k, 0)),   # x streams
            pl.BlockSpec((D_pad, D_pad), lambda i, k: (0, 0)),       # weight resident
            pl.BlockSpec((1, D_pad), lambda i, k: (0, 0)),           # bias resident
        ],
        out_specs=pl.BlockSpec((TB, D_pad), lambda i, k: (i, 0)),
        scratch_shapes=[pltpu.VMEM((TB, D_pad), jnp.float32)],
        compiler_params=pltpu.CompilerParams(
            dimension_semantics=("parallel", "arbitrary"),
            vmem_limit_bytes=32 * 1024 * 1024,
        ),
        cost_estimate=cost,
    )(x, weight, b2)

    return out_pad[:B, :D]


if __name__ == "__main__":
    B, N, D = 2, 8, 32  # batch, seq, hidden(dim) — matches nn.Linear(dim, dim)

    key = jax.random.PRNGKey(0)
    kx, kw, kb = jax.random.split(key, 3)

    x = jax.random.normal(kx, (B, N, D), dtype=jnp.float32)
    # Deterministic parameter init (same shapes as nn.Linear(dim, dim)):
    # weight [D, D] (out, in), bias [D].
    bound = 1.0 / jnp.sqrt(D)
    weight = jax.random.uniform(kw, (D, D), minval=-bound, maxval=bound,
                                dtype=jnp.float32)
    bias = jax.random.uniform(kb, (D,), minval=-bound, maxval=bound,
                              dtype=jnp.float32)

    out = linear_fusion(x, weight, bias)
    out = jax.block_until_ready(out)

    # Pure-JAX reference (same semantics as the PyTorch forward).
    ref = jnp.mean(x, axis=1) @ weight.T + bias
    assert out.shape == (B, D)
    assert jnp.allclose(out, ref, atol=1e-5, rtol=1e-5), "mismatch vs reference"

    print("KERNEL_OK")
</pallas_src>

<mosaic_0001>
module attributes {stable_mosaic.version = 11 : i64} {
  func.func @_linear_fusion_kernel(%arg0: i32, %arg1: i32, %arg2: memref<8x8x128xf32, #tpu.memory_space<vmem>>, %arg3: memref<128x128xf32, #tpu.memory_space<vmem>>, %arg4: memref<1x128xf32, #tpu.memory_space<vmem>>, %arg5: memref<8x128xf32, #tpu.memory_space<vmem>>, %arg6: memref<8x128xf32, #tpu.memory_space<vmem>>) attributes {dimension_semantics = [#tpu.dimension_semantics<parallel>, #tpu.dimension_semantics<arbitrary>], iteration_bounds = array<i64: 1, 1>, scalar_prefetch = 0 : i64, scratch_operands = 1 : i64, tpu.core_type = #tpu.core_type<tc>, window_params = [{transform_indices = @transform_0, window_bounds = array<i64: 8, 8, 128>}, {pipeline_mode = #tpu.pipeline_mode<synchronous>, transform_indices = @transform_1, window_bounds = array<i64: 128, 128>}, {pipeline_mode = #tpu.pipeline_mode<synchronous>, transform_indices = @transform_2, window_bounds = array<i64: 1, 128>}, {transform_indices = @transform_3, window_bounds = array<i64: 8, 128>}]} {
    %c0_i32 = arith.constant 0 : i32
    %0 = arith.cmpi eq, %arg1, %c0_i32 : i32
    %1 = arith.extui %0 : i1 to i32
    %c0_i32_0 = arith.constant 0 : i32
    %2 = arith.cmpi ne, %1, %c0_i32_0 : i32
    scf.if %2 {
      %cst_9 = arith.constant 0.000000e+00 : f32
      %11 = vector.broadcast %cst_9 : f32 to vector<8x128xf32>
      %c0_10 = arith.constant 0 : index
      %c0_11 = arith.constant 0 : index
      %12 = vector.load %arg6[%c0_10, %c0_11] : memref<8x128xf32, #tpu.memory_space<vmem>>, vector<8x128xf32>
      tpu.vector_store %arg6[%c0_10, %c0_11], %11 {strides = array<i32>} : memref<8x128xf32, #tpu.memory_space<vmem>>, vector<8x128xf32>,
    } else {
    }
    %c0 = arith.constant 0 : index
    %c0_1 = arith.constant 0 : index
    %3 = vector.load %arg6[%c0, %c0_1] : memref<8x128xf32, #tpu.memory_space<vmem>>, vector<8x128xf32>
    %c0_2 = arith.constant 0 : index
    %c0_3 = arith.constant 0 : index
    %c0_4 = arith.constant 0 : index
    %4 = vector.load %arg2[%c0_2, %c0_3, %c0_4] : memref<8x8x128xf32, #tpu.memory_space<vmem>>, vector<8x8x128xf32>
    %cst = arith.constant dense<0.000000e+00> : vector<8x128xf32>
    %5 = vector.multi_reduction <add>, %4, %cst [1] : vector<8x8x128xf32> to vector<8x128xf32>
    %6 = arith.addf %3, %5 : vector<8x128xf32>
    %c0_5 = arith.constant 0 : index
    %c0_6 = arith.constant 0 : index
    %7 = vector.load %arg6[%c0_5, %c0_6] : memref<8x128xf32, #tpu.memory_space<vmem>>, vector<8x128xf32>
    tpu.vector_store %arg6[%c0_5, %c0_6], %6 {strides = array<i32>} : memref<8x128xf32, #tpu.memory_space<vmem>>, vector<8x128xf32>,
    %c0_i32_7 = arith.constant 0 : i32
    %8 = arith.cmpi eq, %arg1, %c0_i32_7 : i32
    %9 = arith.extui %8 : i1 to i32
    %c0_i32_8 = arith.constant 0 : i32
    %10 = arith.cmpi ne, %9, %c0_i32_8 : i32
    scf.if %10 {
      %c0_9 = arith.constant 0 : index
      %c0_10 = arith.constant 0 : index
      %11 = vector.load %arg6[%c0_9, %c0_10] : memref<8x128xf32, #tpu.memory_space<vmem>>, vector<8x128xf32>
      %cst_11 = arith.constant 1.250000e-01 : f32
      %12 = vector.broadcast %cst_11 : f32 to vector<8x128xf32>
      %13 = arith.mulf %11, %12 : vector<8x128xf32>
      %c0_12 = arith.constant 0 : index
      %c0_13 = arith.constant 0 : index
      %14 = vector.load %arg3[%c0_12, %c0_13] : memref<128x128xf32, #tpu.memory_space<vmem>>, vector<128x128xf32>
      %cst_14 = arith.constant dense<0.000000e+00> : vector<8x128xf32>
      %15 = tpu.matmul %13, %14, %cst_14 {dimension_numbers = #tpu.dot_dimension_numbers<[1], [1], [0], [0], [0, 0, 1, 0], [], []>} : vector<8x128xf32>, vector<128x128xf32>, vector<8x128xf32> -> vector<8x128xf32>
      %c0_15 = arith.constant 0 : index
      %c0_16 = arith.constant 0 : index
      %16 = vector.load %arg4[%c0_15, %c0_16] : memref<1x128xf32, #tpu.memory_space<vmem>>, vector<1x128xf32>
      %17 = vector.broadcast %16 : vector<1x128xf32> to vector<8x128xf32>
      %18 = arith.addf %15, %17 : vector<8x128xf32>
      %c0_17 = arith.constant 0 : index
      %c0_18 = arith.constant 0 : index
      %19 = vector.load %arg5[%c0_17, %c0_18] : memref<8x128xf32, #tpu.memory_space<vmem>>, vector<8x128xf32>
      tpu.vector_store %arg5[%c0_17, %c0_18], %18 {strides = array<i32>} : memref<8x128xf32, #tpu.memory_space<vmem>>, vector<8x128xf32>,
    } else {
    }
    return
  }
  func.func @transform_0(%arg0: i32, %arg1: i32) -> (i32, i32, i32) {
    %c0_i32 = arith.constant 0 : i32
    %c0_i32_0 = arith.constant 0 : i32
    return %arg0, %arg1, %c0_i32 : i32, i32, i32
  }
  func.func @transform_1(%arg0: i32, %arg1: i32) -> (i32, i32) {
    %c0_i32 = arith.constant 0 : i32
    %c0_i32_0 = arith.constant 0 : i32
    %c0_i32_1 = arith.constant 0 : i32
    return %c0_i32, %c0_i32_0 : i32, i32
  }
  func.func @transform_2(%arg0: i32, %arg1: i32) -> (i32, i32) {
    %c0_i32 = arith.constant 0 : i32
    %c0_i32_0 = arith.constant 0 : i32
    %c0_i32_1 = arith.constant 0 : i32
    return %c0_i32, %c0_i32_0 : i32, i32
  }
  func.func @transform_3(%arg0: i32, %arg1: i32) -> (i32, i32) {
    %c0_i32 = arith.constant 0 : i32
    %c0_i32_0 = arith.constant 0 : i32
    return %arg0, %c0_i32 : i32, i32
  }
}

</mosaic_0001>

<llo_original>
// kernel: tpu_custom_call.1
$region0: #{tpu_custom_call.1}
  #allocation0 [shape = 'u32[]', space=smem, size = 0x4, offset = 0x4, fixed_abs, tag = 'smem constant byte address 0x4 - core index']
  #allocation1 [shape = 'u32[72,128]{1,0:T(1,128)}', space=vmem, size = 0x9000, scoped, tag = 'internal scratch']
  #allocation2 [shape = 'f32[8,128]{1,0:T(8,128)}', space=vmem, size = 0x1000, scoped, tag = 'scratch operand']
  %s0 = inlined_call_operand.hbm [shape: f32[8,8,128], index: 0, kind: input, shape index: {}]
  %s1 = inlined_call_operand.hbm [shape: f32[128,128], index: 1, kind: input, shape index: {}]
  %s2 = inlined_call_operand.vmem [shape: f32[1,128], index: 2, kind: input, shape index: {}]
  %s3 = inlined_call_operand.hbm [shape: f32[8,128], index: 3, kind: output, shape index: {}]
  %s4 = sld [smem:[#allocation0]]
  $region38: #{tpu_custom_call.1} parent=0
    _
  %s6 = ssub.s32 1, %s4
  %s7 = scalar_select 0, %s6, %s4
  $region1: #{tpu_custom_call.1} parent=0
    #allocation3 [shape = 'u8[32768]{0}', space=vmem, size = 0x8000, scoped, tag = 'input window, operand 0, single buffered']
    #allocation4 [shape = 's32[1]{0}', space=sflag, size = 0x4, scoped, tag = 'scoped memory for tpu_custom_call.1']
    #allocation5 [shape = 's32[1]{0}', space=sflag, size = 0x4, scoped, tag = 'scoped memory for tpu_custom_call.1']
    #allocation6 [shape = 'u8[65536]{0}', space=vmem, size = 0x10000, scoped, tag = 'input window, operand 1, single buffered']
    #allocation7 [shape = 's32[1]{0}', space=sflag, size = 0x4, scoped, tag = 'scoped memory for tpu_custom_call.1']
    #allocation8 [shape = 'u8[4096]{0}', space=vmem, size = 0x1000, scoped, tag = 'output window, operand 0, single buffered']
    %8 = vsyncpa [#allocation4], 0
    %9 = vsyncpa [#allocation7], 0
    %10 = vsyncpa [#allocation5], 0
    // Predicated region
    $region2: #{tpu_custom_call.1} parent=1 // pred_check
      _
    $region3: #{tpu_custom_call.1} parent=1 // pred_check_branch
      %12 = sbr.rel (0) target = $region5
    $region4: #{tpu_custom_call.1} parent=1 // pred_region
      %14 = vsyncadd [#allocation4], 0
      %s15 = sshll.u32 %s0, 4
      %s16 = int_to_ptr.hbm [resolvable:$true] %s15
      %s17 = sshll.u32 [#allocation3], 4
      %s18 = int_to_ptr.vmem [resolvable:$true] %s17
      %23 = dma.hbm_to_vmem [thread:$0]  %s16, 1024, %s18, [#allocation4], 128, 128, 8
    $region5: #{tpu_custom_call.1} parent=1 // pred_fallthru
      _
    // Predicated region
    $region6: #{tpu_custom_call.1} parent=1 // pred_check
      _
    $region7: #{tpu_custom_call.1} parent=1 // pred_check_branch
      %25 = sbr.rel (0) target = $region9
    $region8: #{tpu_custom_call.1} parent=1 // pred_region
      %27 = vsyncadd [#allocation7], 0
      %s28 = sshll.u32 %s1, 4
      %s29 = int_to_ptr.hbm [resolvable:$true] %s28
      %s30 = sshll.u32 [#allocation6], 4
      %s31 = int_to_ptr.vmem [resolvable:$true] %s30
      %36 = dma.hbm_to_vmem [thread:$0]  %s29, 2048, %s31, [#allocation7], 128, 128, 8
    $region9: #{tpu_custom_call.1} parent=1 // pred_fallthru
      _
    // Predicated region
    $region10: #{tpu_custom_call.1} parent=1 // pred_check
      _
    $region11: #{tpu_custom_call.1} parent=1 // pred_check_branch
      %38 = sbr.rel (0) target = $region13
    $region12: #{tpu_custom_call.1} parent=1 // pred_region
      _
    $region13: #{tpu_custom_call.1} parent=1 // pred_fallthru
      _
    // Predicated region
    $region14: #{tpu_custom_call.1} parent=1 // pred_check
      _
    $region15: #{tpu_custom_call.1} parent=1 // pred_check_branch
      %40 = sbr.rel (0) target = $region17
    $region16: #{tpu_custom_call.1} parent=1 // pred_region
      %42 = dma.done [#allocation4], 1024
    $region17: #{tpu_custom_call.1} parent=1 // pred_fallthru
      _
    // Predicated region
    $region18: #{tpu_custom_call.1} parent=1 // pred_check
      _
    $region19: #{tpu_custom_call.1} parent=1 // pred_check_branch
      %44 = sbr.rel (0) target = $region21
    $region20: #{tpu_custom_call.1} parent=1 // pred_region
      %46 = dma.done [#allocation7], 2048
    $region21: #{tpu_custom_call.1} parent=1 // pred_fallthru
      _
    %p47 = scmp.eq.s32.totalorder 0, 0
    // Predicated region
    $region22: #{tpu_custom_call.1} parent=1 // pred_check
      %p48 = pneg %p47
    $region23: #{tpu_custom_call.1} parent=1 // pred_check_branch
      %50 = sbr.rel (%p48) target = $region25
    $region24: #{tpu_custom_call.1} parent=1 // pred_region
      %51 = vst [vmem:[#allocation2] sm:$0xff] 0.0
    $region25: #{tpu_custom_call.1} parent=1 // pred_fallthru
      _
    %v52 = vld [vmem:[#allocation2] sm:$0xff]
    %v53 = vld [vmem:[#allocation3] sm:$0xff]
    %v54 = vld [vmem:[#allocation3 + $0x8] sm:$0xff]
    %v55 = vld [vmem:[#allocation3 + $0x10] sm:$0xff]
    %v56 = vld [vmem:[#allocation3 + $0x18] sm:$0xff]
    %v57 = vld [vmem:[#allocation3 + $0x20] sm:$0xff]
    %v58 = vld [vmem:[#allocation3 + $0x28] sm:$0xff]
    %v59 = vld [vmem:[#allocation3 + $0x30] sm:$0xff]
    %v60 = vld [vmem:[#allocation3 + $0x38] sm:$0xff]
    %v61 = vrot.slane %v53, 4
    %v62 = vadd.f32 %v53, %v61
    %v63 = vrot.slane %v62, 2
    %v64 = vadd.f32 %v62, %v63
    %v65 = vrot.slane %v64, 1
    %v66 = vadd.f32 %v64, %v65
    %v67 = vrot.slane %v54, 4
    %v68 = vadd.f32 %v54, %v67
    %v69 = vrot.slane %v68, 2
    %v70 = vadd.f32 %v68, %v69
    %v71 = vrot.slane %v70, 1
    %v72 = vadd.f32 %v70, %v71
    %v73 = vrot.slane %v55, 4
    %v74 = vadd.f32 %v55, %v73
    %v75 = vrot.slane %v74, 2
    %v76 = vadd.f32 %v74, %v75
    %v77 = vrot.slane %v76, 1
    %v78 = vadd.f32 %v76, %v77
    %v79 = vrot.slane %v56, 4
    %v80 = vadd.f32 %v56, %v79
    %v81 = vrot.slane %v80, 2
    %v82 = vadd.f32 %v80, %v81
    %v83 = vrot.slane %v82, 1
    %v84 = vadd.f32 %v82, %v83
    %v85 = vrot.slane %v57, 4
    %v86 = vadd.f32 %v57, %v85
    %v87 = vrot.slane %v86, 2
    %v88 = vadd.f32 %v86, %v87
    %v89 = vrot.slane %v88, 1
    %v90 = vadd.f32 %v88, %v89
    %v91 = vrot.slane %v58, 4
    %v92 = vadd.f32 %v58, %v91
    %v93 = vrot.slane %v92, 2
    %v94 = vadd.f32 %v92, %v93
    %v95 = vrot.slane %v94, 1
    %v96 = vadd.f32 %v94, %v95
    %v97 = vrot.slane %v59, 4
    %v98 = vadd.f32 %v59, %v97
    %v99 = vrot.slane %v98, 2
    %v100 = vadd.f32 %v98, %v99
    %v101 = vrot.slane %v100, 1
    %v102 = vadd.f32 %v100, %v101
    %v103 = vrot.slane %v60, 4
    %v104 = vadd.f32 %v60, %v103
    %v105 = vrot.slane %v104, 2
    %v106 = vadd.f32 %v104, %v105
    %v107 = vrot.slane %v106, 1
    %v108 = vadd.f32 %v106, %v107
    %vm117 = vcmask 1041409
    %v118 = vsel %vm117, %v72, %v66
    %vm119 = vcmask 1042434
    %v120 = vsel %vm119, %v78, %v118
    %vm121 = vcmask 1043459
    %v122 = vsel %vm121, %v84, %v120
    %vm123 = vcmask 1044484
    %v124 = vsel %vm123, %v90, %v122
    %vm125 = vcmask 1045509
    %v126 = vsel %vm125, %v96, %v124
    %vm127 = vcmask 1046534
    %v128 = vsel %vm127, %v102, %v126
    %vm129 = vcmask 1047559
    %v130 = vsel %vm129, %v108, %v128
    %v132 = vadd.f32 %v52, %v130
    %133 = vst [vmem:[#allocation2] sm:$0xff] %v132
    // Predicated region
    $region26: #{tpu_custom_call.1} parent=1 // pred_check
      %p134 = pneg %p47
    $region27: #{tpu_custom_call.1} parent=1 // pred_check_branch
      %136 = sbr.rel (%p134) target = $region29
    $region28: #{tpu_custom_call.1} parent=1 // pred_region
      %v137 = vld [vmem:[#allocation2] sm:$0xff]
      %v138 = vmul.f32 %v137, 0.125
      %v139 = vld [vmem:[#allocation6] sm:$0xff]
      %v140 = vld [vmem:[#allocation6 + $0x8] sm:$0xff]
      %v141 = vld [vmem:[#allocation6 + $0x10] sm:$0xff]
      %v142 = vld [vmem:[#allocation6 + $0x18] sm:$0xff]
      %v143 = vld [vmem:[#allocation6 + $0x20] sm:$0xff]
      %v144 = vld [vmem:[#allocation6 + $0x28] sm:$0xff]
      %v145 = vld [vmem:[#allocation6 + $0x30] sm:$0xff]
      %v146 = vld [vmem:[#allocation6 + $0x38] sm:$0xff]
      %v147 = vld [vmem:[#allocation6 + $0x40] sm:$0xff]
      %v148 = vld [vmem:[#allocation6 + $0x48] sm:$0xff]
      %v149 = vld [vmem:[#allocation6 + $0x50] sm:$0xff]
      %v150 = vld [vmem:[#allocation6 + $0x58] sm:$0xff]
      %v151 = vld [vmem:[#allocation6 + $0x60] sm:$0xff]
      %v152 = vld [vmem:[#allocation6 + $0x68] sm:$0xff]
      %v153 = vld [vmem:[#allocation6 + $0x70] sm:$0xff]
      %v154 = vld [vmem:[#allocation6 + $0x78] sm:$0xff]
      %v155 = vld [vmem:[%s2] sm:$0x1]
      %v157 = vperm.slane %v155, 0
      %159 = vmatpush.xpose.msra.mxu0 %v154
      %160 = vmatpush.xpose.msra.mxu0 %v153
      %161 = vmatpush.xpose.msra.mxu0 %v152
      %162 = vmatpush.xpose.msra.mxu0 %v151
      %163 = vmatpush.xpose.msra.mxu0 %v150
      %164 = vmatpush.xpose.msra.mxu0 %v149
      %165 = vmatpush.xpose.msra.mxu0 %v148
      %166 = vmatpush.xpose.msra.mxu0 %v147
      %167 = vmatpush.xpose.msra.mxu0 %v146
      %168 = vmatpush.xpose.msra.mxu0 %v145
      %169 = vmatpush.xpose.msra.mxu0 %v144
      %170 = vmatpush.xpose.msra.mxu0 %v143
      %171 = vmatpush.xpose.msra.mxu0 %v142
      %172 = vmatpush.xpose.msra.mxu0 %v141
      %173 = vmatpush.xpose.msra.mxu0 %v140
      %174 = vmatpush.xpose.msra.mxu0 %v139
      %175 = vmatmul.f32.gmra.mxu0 %v138
      %v176 = vpop.f32.mrf.mxu0
      %v177 = vadd.f32 %v157, %v176
      %178 = vdwg.mxu0
      %179 = vst [vmem:[#allocation8] sm:$0xff] %v177
    $region29: #{tpu_custom_call.1} parent=1 // pred_fallthru
      _
    // Predicated region
    $region30: #{tpu_custom_call.1} parent=1 // pred_check
      _
    $region31: #{tpu_custom_call.1} parent=1 // pred_check_branch
      %181 = sbr.rel (0) target = $region33
    $region32: #{tpu_custom_call.1} parent=1 // pred_region
      %183 = vsyncadd [#allocation5], 0
      %s185 = sshll.u32 [#allocation8], 4
      %s186 = int_to_ptr.vmem [resolvable:$true] %s185
      %s187 = sshll.u32 %s3, 4
      %s188 = int_to_ptr.hbm [resolvable:$true] %s187
      %190 = dma.vmem_to_hbm [thread:$0]  %s186, 128, %s188, [#allocation5]
    $region33: #{tpu_custom_call.1} parent=1 // pred_fallthru
      _
    // Predicated region
    $region34: #{tpu_custom_call.1} parent=1 // pred_check
      _
    $region35: #{tpu_custom_call.1} parent=1 // pred_check_branch
      %192 = sbr.rel (0) target = $region37
    $region36: #{tpu_custom_call.1} parent=1 // pred_region
      %194 = dma.done [#allocation5], 128
    $region37: #{tpu_custom_call.1} parent=1 // pred_fallthru
      _
    %195 = vsyncpa [#allocation4], 1
    %196 = vsyncpa [#allocation7], 1
    %197 = vsyncpa [#allocation5], 1

</llo_original>
